<compile_context>
chip_gen: v7x
topology: tpu7x:2x2x1
jax: 0.10.0
libtpu: 0.0.40
codegen_flags: <defaults>
</compile_context>

<pallas_src>
import jax
import jax.numpy as jnp
from jax.experimental import pallas as pl
from jax.experimental.pallas import tpu as pltpu

NUM_CLASS = 10
NUM_HIDDEN = 200
NUM_INPUT = 28 * 28        # 784

HIDDEN_PAD = 256           # 200 -> 256: clean MXU / lane tiles
OUT_PAD = 128              # 10  -> 128: lane-dense output stores (no vst.msk)
MAX_BATCH_TILE = 2048      # rows per grid step (f32 x tile ~6.3 MiB, 2x buffered)


def mlp_kernel(x_ref, w1_ref, b1_ref, w2_ref, b2_ref, out_ref):
    # x arrives straight from HBM as f32; cast to bf16 in-kernel (VPU) right
    # before the MXU feed so no separate convert pass over x is needed.
    x_bf16 = x_ref[...].astype(jnp.bfloat16)
    # (TB, 784) bf16 @ (784, 256) bf16 -> f32 accumulation on the MXU.
    h = jnp.dot(x_bf16, w1_ref[...], preferred_element_type=jnp.float32)
    h = jnp.maximum(h + b1_ref[...], 0.0)            # bias + ReLU in f32 (VPU)
    # Second matmul: activations back to bf16 for the fast MXU path, f32 accum.
    o = jnp.dot(h.astype(jnp.bfloat16), w2_ref[...],
                preferred_element_type=jnp.float32)
    out_ref[...] = (o + b2_ref[...]).astype(out_ref.dtype)


def _round_up(x, m):
    return ((x + m - 1) // m) * m


def prepare_params(w1, b1, w2, b2):
    """One-time weight/bias padding + bf16 cast (hoisted out of the forward).

    Weights are stored as (in_features, out_features) == torch weight
    transposed, so the kernel computes x @ W + b (same math as x @ W.T + b).
    """
    w1_p = jnp.pad(w1, ((0, 0), (0, HIDDEN_PAD - NUM_HIDDEN))).astype(jnp.bfloat16)
    b1_p = jnp.pad(b1, (0, HIDDEN_PAD - NUM_HIDDEN)).reshape(1, HIDDEN_PAD)
    b1_p = b1_p.astype(jnp.float32)
    w2_p = jnp.pad(w2, ((0, HIDDEN_PAD - NUM_HIDDEN),
                        (0, OUT_PAD - NUM_CLASS))).astype(jnp.bfloat16)
    b2_p = jnp.pad(b2, (0, OUT_PAD - NUM_CLASS)).reshape(1, OUT_PAD)
    b2_p = b2_p.astype(jnp.float32)
    return w1_p, b1_p, w2_p, b2_p


def _pick_batch_tile(batch, max_tile):
    # Aim for >= 2 grid steps whenever batch allows so the "parallel" batch
    # axis shards across both TensorCores on v7x; keep the tile a multiple of
    # 8 (sublanes) and cap it so double-buffered f32 tiles fit VMEM.
    tb = _round_up(max(pl.cdiv(batch, 2), 1), 8)
    return max(8, min(tb, max_tile))


def neural_net_forward(x, w1_p, b1_p, w2_p, b2_p, *, batch_tile=MAX_BATCH_TILE):
    """x: (B, 784) f32 (or bf16); padded params from prepare_params().
    Returns (B, 10) f32 logits. Call inside the consumer's jit so the final
    class-dim slice fuses with the kernel output."""
    batch = x.shape[0]
    tb = _pick_batch_tile(batch, batch_tile)
    # No batch padding: cdiv grid; the partial last tile's OOB rows only feed
    # output rows that Pallas clips on writeback (rows are independent).
    grid = (pl.cdiv(batch, tb),)

    cost = pl.CostEstimate(
        flops=2 * batch * (NUM_INPUT * HIDDEN_PAD + HIDDEN_PAD * OUT_PAD),
        transcendentals=0,
        bytes_accessed=(x.size * x.dtype.itemsize
                        + w1_p.size * 2 + w2_p.size * 2
                        + b1_p.size * 4 + b2_p.size * 4
                        + batch * OUT_PAD * 4),
    )

    out_padded = pl.pallas_call(
        mlp_kernel,
        out_shape=jax.ShapeDtypeStruct((batch, OUT_PAD), jnp.float32),
        grid=grid,
        in_specs=[
            pl.BlockSpec((tb, NUM_INPUT), lambda i: (i, 0)),          # x: batch-tiled
            pl.BlockSpec((NUM_INPUT, HIDDEN_PAD), lambda i: (0, 0)),  # w1: resident
            pl.BlockSpec((1, HIDDEN_PAD), lambda i: (0, 0)),          # b1: resident
            pl.BlockSpec((HIDDEN_PAD, OUT_PAD), lambda i: (0, 0)),    # w2: resident
            pl.BlockSpec((1, OUT_PAD), lambda i: (0, 0)),             # b2: resident
        ],
        out_specs=pl.BlockSpec((tb, OUT_PAD), lambda i: (i, 0)),
        compiler_params=pltpu.CompilerParams(
            dimension_semantics=("parallel",),   # shards batch across TCs on v7x
            vmem_limit_bytes=32 * 1024 * 1024,
        ),
        cost_estimate=cost,
    )(x, w1_p, b1_p, w2_p, b2_p)

    # Drop the 118 zero-padded class columns (fused into the jit'd graph).
    return out_padded[:, :NUM_CLASS]


def init_params(key):
    """Deterministic init mimicking nn.Linear defaults: U(-1/sqrt(fan_in), +)."""
    k1, k2, k3, k4 = jax.random.split(key, 4)
    bound1 = 1.0 / jnp.sqrt(NUM_INPUT)
    bound2 = 1.0 / jnp.sqrt(NUM_HIDDEN)
    # Stored as (in, out) = torch weight transposed.
    w1 = jax.random.uniform(k1, (NUM_INPUT, NUM_HIDDEN), jnp.float32,
                            -bound1, bound1)
    b1 = jax.random.uniform(k2, (NUM_HIDDEN,), jnp.float32, -bound1, bound1)
    w2 = jax.random.uniform(k3, (NUM_HIDDEN, NUM_CLASS), jnp.float32,
                            -bound2, bound2)
    b2 = jax.random.uniform(k4, (NUM_CLASS,), jnp.float32, -bound2, bound2)
    return w1, b1, w2, b2


def _reference(x, w1, b1, w2, b2):
    # Pure-JAX reference modelling the same bf16 operand rounding the kernel
    # uses (f32 accumulation), so comparison tolerance stays tight. Note this
    # differs slightly from a pure-f32 torch forward (documented tolerance).
    xb = x.astype(jnp.bfloat16).astype(jnp.float32)
    w1b = w1.astype(jnp.bfloat16).astype(jnp.float32)
    w2b = w2.astype(jnp.bfloat16).astype(jnp.float32)
    h = jnp.maximum(
        jnp.dot(xb, w1b, precision=jax.lax.Precision.HIGHEST) + b1, 0.0)
    hb = h.astype(jnp.bfloat16).astype(jnp.float32)
    return jnp.dot(hb, w2b, precision=jax.lax.Precision.HIGHEST) + b2


if __name__ == "__main__":
    key = jax.random.PRNGKey(0)
    k_x, k_p = jax.random.split(key)
    w1, b1, w2, b2 = init_params(k_p)
    # Params padded/cast ONCE (not per forward call).
    w1_p, b1_p, w2_p, b2_p = prepare_params(w1, b1, w2, b2)

    # Jit the forward so the trailing class-dim slice fuses with the kernel.
    fwd = jax.jit(neural_net_forward, static_argnames=("batch_tile",))

    # Test 1: single grid step (batch 8).
    batch = 8
    x = jax.random.normal(k_x, (batch, NUM_INPUT), jnp.float32)
    out = jax.block_until_ready(fwd(x, w1_p, b1_p, w2_p, b2_p))
    ref = _reference(x, w1, b1, w2, b2)
    assert out.shape == (batch, NUM_CLASS)
    assert jnp.allclose(out, ref, atol=2e-3, rtol=2e-3)

    # Test 2: multi-step grid + partial (OOB-clipped) last tile:
    # batch 20, tile 8 -> grid of 3 steps, last tile covers only 4 valid rows.
    batch2 = 20
    x2 = jax.random.normal(jax.random.PRNGKey(1), (batch2, NUM_INPUT), jnp.float32)
    out2 = jax.block_until_ready(
        fwd(x2, w1_p, b1_p, w2_p, b2_p, batch_tile=8))
    ref2 = _reference(x2, w1, b1, w2, b2)
    assert out2.shape == (batch2, NUM_CLASS)
    assert jnp.allclose(out2, ref2, atol=2e-3, rtol=2e-3)

    print("KERNEL_OK")
</pallas_src>

<mosaic_0001>
module attributes {stable_mosaic.version = 11 : i64} {
  func.func @mlp_kernel(%arg0: i32, %arg1: memref<8x784xf32, #tpu.memory_space<vmem>>, %arg2: memref<784x256xbf16, #tpu.memory_space<vmem>>, %arg3: memref<1x256xf32, #tpu.memory_space<vmem>>, %arg4: memref<256x128xbf16, #tpu.memory_space<vmem>>, %arg5: memref<1x128xf32, #tpu.memory_space<vmem>>, %arg6: memref<8x128xf32, #tpu.memory_space<vmem>>) attributes {dimension_semantics = [#tpu.dimension_semantics<parallel>], iteration_bounds = array<i64: 1>, scalar_prefetch = 0 : i64, scratch_operands = 0 : i64, tpu.core_type = #tpu.core_type<tc>, window_params = [{transform_indices = @transform_0, window_bounds = array<i64: 8, 784>}, {pipeline_mode = #tpu.pipeline_mode<synchronous>, transform_indices = @transform_1, window_bounds = array<i64: 784, 256>}, {pipeline_mode = #tpu.pipeline_mode<synchronous>, transform_indices = @transform_2, window_bounds = array<i64: 1, 256>}, {pipeline_mode = #tpu.pipeline_mode<synchronous>, transform_indices = @transform_3, window_bounds = array<i64: 256, 128>}, {pipeline_mode = #tpu.pipeline_mode<synchronous>, transform_indices = @transform_4, window_bounds = array<i64: 1, 128>}, {transform_indices = @transform_5, window_bounds = array<i64: 8, 128>}]} {
    %c0 = arith.constant 0 : index
    %c0_0 = arith.constant 0 : index
    %0 = vector.load %arg1[%c0, %c0_0] : memref<8x784xf32, #tpu.memory_space<vmem>>, vector<8x784xf32>
    %1 = arith.truncf %0 : vector<8x784xf32> to vector<8x784xbf16>
    %c0_1 = arith.constant 0 : index
    %c0_2 = arith.constant 0 : index
    %2 = vector.load %arg2[%c0_1, %c0_2] : memref<784x256xbf16, #tpu.memory_space<vmem>>, vector<784x256xbf16>
    %cst = arith.constant dense<0.000000e+00> : vector<8x256xf32>
    %3 = tpu.matmul %1, %2, %cst {dimension_numbers = #tpu.dot_dimension_numbers<[1], [0], [0], [1], [0, 0, 1, 1], [], []>} : vector<8x784xbf16>, vector<784x256xbf16>, vector<8x256xf32> -> vector<8x256xf32>
    %c0_3 = arith.constant 0 : index
    %c0_4 = arith.constant 0 : index
    %4 = vector.load %arg3[%c0_3, %c0_4] : memref<1x256xf32, #tpu.memory_space<vmem>>, vector<1x256xf32>
    %5 = vector.broadcast %4 : vector<1x256xf32> to vector<8x256xf32>
    %6 = arith.addf %3, %5 : vector<8x256xf32>
    %cst_5 = arith.constant 0.000000e+00 : f32
    %7 = vector.broadcast %cst_5 : f32 to vector<8x256xf32>
    %8 = arith.maximumf %6, %7 : vector<8x256xf32>
    %9 = arith.truncf %8 : vector<8x256xf32> to vector<8x256xbf16>
    %c0_6 = arith.constant 0 : index
    %c0_7 = arith.constant 0 : index
    %10 = vector.load %arg4[%c0_6, %c0_7] : memref<256x128xbf16, #tpu.memory_space<vmem>>, vector<256x128xbf16>
    %cst_8 = arith.constant dense<0.000000e+00> : vector<8x128xf32>
    %11 = tpu.matmul %9, %10, %cst_8 {dimension_numbers = #tpu.dot_dimension_numbers<[1], [0], [0], [1], [0, 0, 1, 1], [], []>} : vector<8x256xbf16>, vector<256x128xbf16>, vector<8x128xf32> -> vector<8x128xf32>
    %c0_9 = arith.constant 0 : index
    %c0_10 = arith.constant 0 : index
    %12 = vector.load %arg5[%c0_9, %c0_10] : memref<1x128xf32, #tpu.memory_space<vmem>>, vector<1x128xf32>
    %13 = vector.broadcast %12 : vector<1x128xf32> to vector<8x128xf32>
    %14 = arith.addf %11, %13 : vector<8x128xf32>
    %c0_11 = arith.constant 0 : index
    %c0_12 = arith.constant 0 : index
    %15 = vector.load %arg6[%c0_11, %c0_12] : memref<8x128xf32, #tpu.memory_space<vmem>>, vector<8x128xf32>
    tpu.vector_store %arg6[%c0_11, %c0_12], %14 {strides = array<i32>} : memref<8x128xf32, #tpu.memory_space<vmem>>, vector<8x128xf32>,
    return
  }
  func.func @transform_0(%arg0: i32) -> (i32, i32) {
    %c0_i32 = arith.constant 0 : i32
    %c0_i32_0 = arith.constant 0 : i32
    return %arg0, %c0_i32 : i32, i32
  }
  func.func @transform_1(%arg0: i32) -> (i32, i32) {
    %c0_i32 = arith.constant 0 : i32
    %c0_i32_0 = arith.constant 0 : i32
    %c0_i32_1 = arith.constant 0 : i32
    return %c0_i32, %c0_i32_0 : i32, i32
  }
  func.func @transform_2(%arg0: i32) -> (i32, i32) {
    %c0_i32 = arith.constant 0 : i32
    %c0_i32_0 = arith.constant 0 : i32
    %c0_i32_1 = arith.constant 0 : i32
    return %c0_i32, %c0_i32_0 : i32, i32
  }
  func.func @transform_3(%arg0: i32) -> (i32, i32) {
    %c0_i32 = arith.constant 0 : i32
    %c0_i32_0 = arith.constant 0 : i32
    %c0_i32_1 = arith.constant 0 : i32
    return %c0_i32, %c0_i32_0 : i32, i32
  }
  func.func @transform_4(%arg0: i32) -> (i32, i32) {
    %c0_i32 = arith.constant 0 : i32
    %c0_i32_0 = arith.constant 0 : i32
    %c0_i32_1 = arith.constant 0 : i32
    return %c0_i32, %c0_i32_0 : i32, i32
  }
  func.func @transform_5(%arg0: i32) -> (i32, i32) {
    %c0_i32 = arith.constant 0 : i32
    %c0_i32_0 = arith.constant 0 : i32
    return %arg0, %c0_i32 : i32, i32
  }
}

</mosaic_0001>

<llo_original>
// kernel: neural_net_forward.1
$region0: #{neural_net_forward.1}
  #allocation0 [shape = 'u32[]', space=smem, size = 0x4, offset = 0x4, fixed_abs, tag = 'smem constant byte address 0x4 - core index']
  #allocation1 [shape = 'u32[144,128]{1,0:T(1,128)}', space=vmem, size = 0x12000, scoped, tag = 'internal scratch']
  %s0 = inlined_call_operand.hbm [shape: f32[8,784], index: 0, kind: input, shape index: {}]
  %s1 = inlined_call_operand.hbm [shape: bf16[784,256], index: 1, kind: input, shape index: {}]
  %s2 = inlined_call_operand.vmem [shape: f32[1,256], index: 2, kind: input, shape index: {}]
  %s3 = inlined_call_operand.hbm [shape: bf16[256,128], index: 3, kind: input, shape index: {}]
  %s4 = inlined_call_operand.vmem [shape: f32[1,128], index: 4, kind: input, shape index: {}]
  %s5 = inlined_call_operand.hbm [shape: f32[8,128], index: 5, kind: output, shape index: {}]
  %s6 = sld [smem:[#allocation0]]
  $region42: #{neural_net_forward.1} parent=0
    _
  %s8 = ssub.s32 1, %s6
  %s9 = scalar_select 0, %s8, %s6
  $region1: #{neural_net_forward.1} parent=0
    #allocation2 [shape = 'u8[28672]{0}', space=vmem, size = 0x7000, scoped, tag = 'input window, operand 0, single buffered']
    #allocation3 [shape = 's32[1]{0}', space=sflag, size = 0x4, scoped, tag = 'scoped memory for neural_net_forward.1']
    #allocation4 [shape = 's32[1]{0}', space=sflag, size = 0x4, scoped, tag = 'scoped memory for neural_net_forward.1']
    #allocation5 [shape = 'u8[401408]{0}', space=vmem, size = 0x62000, scoped, tag = 'input window, operand 1, single buffered']
    #allocation6 [shape = 's32[1]{0}', space=sflag, size = 0x4, scoped, tag = 'scoped memory for neural_net_forward.1']
    #allocation7 [shape = 'u8[65536]{0}', space=vmem, size = 0x10000, scoped, tag = 'input window, operand 3, single buffered']
    #allocation8 [shape = 'u8[4096]{0}', space=vmem, size = 0x1000, scoped, tag = 'output window, operand 0, single buffered']
    %10 = vsyncpa [#allocation3], 0
    %11 = vsyncpa [#allocation6], 0
    %12 = vsyncpa [#allocation4], 0
    // Predicated region
    $region2: #{neural_net_forward.1} parent=1 // pred_check
      _
    $region3: #{neural_net_forward.1} parent=1 // pred_check_branch
      %14 = sbr.rel (0) target = $region5
    $region4: #{neural_net_forward.1} parent=1 // pred_region
      %s16 = ssub.s32 896, 896
      %17 = vsyncadd [#allocation3], %s16
      %s19 = sshll.u32 [#allocation2], 4
      %s20 = int_to_ptr.vmem [resolvable:$true] %s19
      %22 = dma.hbm_to_vmem [thread:$0]  %s0, 896, %s20, [#allocation3]
    $region5: #{neural_net_forward.1} parent=1 // pred_fallthru
      _
    // Predicated region
    $region6: #{neural_net_forward.1} parent=1 // pred_check
      _
    $region7: #{neural_net_forward.1} parent=1 // pred_check_branch
      %24 = sbr.rel (0) target = $region9
    $region8: #{neural_net_forward.1} parent=1 // pred_region
      %s26 = ssub.s32 12544, 12544
      %27 = vsyncadd [#allocation6], %s26
      %s28 = sshll.u32 [#allocation5], 4
      %s29 = int_to_ptr.vmem [resolvable:$true] %s28
      %34 = dma.hbm_to_vmem [thread:$0]  %s1, 12544, %s29, [#allocation6], 128, 128, 8
    $region9: #{neural_net_forward.1} parent=1 // pred_fallthru
      _
    // Predicated region
    $region10: #{neural_net_forward.1} parent=1 // pred_check
      _
    $region11: #{neural_net_forward.1} parent=1 // pred_check_branch
      %36 = sbr.rel (0) target = $region13
    $region12: #{neural_net_forward.1} parent=1 // pred_region
      _
    $region13: #{neural_net_forward.1} parent=1 // pred_fallthru
      _
    // Predicated region
    $region14: #{neural_net_forward.1} parent=1 // pred_check
      _
    $region15: #{neural_net_forward.1} parent=1 // pred_check_branch
      %38 = sbr.rel (0) target = $region17
    $region16: #{neural_net_forward.1} parent=1 // pred_region
      %s40 = ssub.s32 2048, 2048
      %41 = vsyncadd [#allocation6], %s40
      %s42 = sshll.u32 [#allocation7], 4
      %s43 = int_to_ptr.vmem [resolvable:$true] %s42
      %48 = dma.hbm_to_vmem [thread:$0]  %s3, 2048, %s43, [#allocation6], 64, 64, 4
    $region17: #{neural_net_forward.1} parent=1 // pred_fallthru
      _
    // Predicated region
    $region18: #{neural_net_forward.1} parent=1 // pred_check
      _
    $region19: #{neural_net_forward.1} parent=1 // pred_check_branch
      %50 = sbr.rel (0) target = $region21
    $region20: #{neural_net_forward.1} parent=1 // pred_region
      _
    $region21: #{neural_net_forward.1} parent=1 // pred_fallthru
      _
    // Predicated region
    $region22: #{neural_net_forward.1} parent=1 // pred_check
      _
    $region23: #{neural_net_forward.1} parent=1 // pred_check_branch
      %52 = sbr.rel (0) target = $region25
    $region24: #{neural_net_forward.1} parent=1 // pred_region
      %53 = dma.done [#allocation3], 896
    $region25: #{neural_net_forward.1} parent=1 // pred_fallthru
      _
    // Predicated region
    $region26: #{neural_net_forward.1} parent=1 // pred_check
      _
    $region27: #{neural_net_forward.1} parent=1 // pred_check_branch
      %55 = sbr.rel (0) target = $region29
    $region28: #{neural_net_forward.1} parent=1 // pred_region
      %56 = dma.done [#allocation6], 12544
    $region29: #{neural_net_forward.1} parent=1 // pred_fallthru
      _
    // Predicated region
    $region30: #{neural_net_forward.1} parent=1 // pred_check
      _
    $region31: #{neural_net_forward.1} parent=1 // pred_check_branch
      %58 = sbr.rel (0) target = $region33
    $region32: #{neural_net_forward.1} parent=1 // pred_region
      %59 = dma.done [#allocation6], 2048
    $region33: #{neural_net_forward.1} parent=1 // pred_fallthru
      _
    %v61 = vld [vmem:[#allocation2] sm:$0xff]
    %v62 = vld [vmem:[#allocation2 + $0x8] sm:$0xff]
    %v63 = vld [vmem:[#allocation2 + $0x10] sm:$0xff]
    %v64 = vld [vmem:[#allocation2 + $0x18] sm:$0xff]
    %v65 = vld [vmem:[#allocation2 + $0x20] sm:$0xff]
    %v66 = vld [vmem:[#allocation2 + $0x28] sm:$0xff]
    %v67 = vld [vmem:[#allocation2 + $0x30] sm:$0xff]
    %v68 = vpack.c.bf16 %v61, %v61
    %v69 = vpack.c.bf16 %v62, %v62
    %v70 = vpack.c.bf16 %v63, %v63
    %v71 = vpack.c.bf16 %v64, %v64
    %v72 = vpack.c.bf16 %v65, %v65
    %v73 = vpack.c.bf16 %v66, %v66
    %v74 = vpack.c.bf16 %v67, %v67
    %v75 = vld [vmem:[#allocation5] sm:$0xff]
    %v76 = vld [vmem:[#allocation5 + $0x8] sm:$0xff]
    %v77 = vld [vmem:[#allocation5 + $0x10] sm:$0xff]
    %v78 = vld [vmem:[#allocation5 + $0x18] sm:$0xff]
    %v79 = vld [vmem:[#allocation5 + $0x20] sm:$0xff]
    %v80 = vld [vmem:[#allocation5 + $0x28] sm:$0xff]
    %v81 = vld [vmem:[#allocation5 + $0x30] sm:$0xff]
    %v82 = vld [vmem:[#allocation5 + $0x38] sm:$0xff]
    %v83 = vld [vmem:[#allocation5 + $0x40] sm:$0xff]
    %v84 = vld [vmem:[#allocation5 + $0x48] sm:$0xff]
    %v85 = vld [vmem:[#allocation5 + $0x50] sm:$0xff]
    %v86 = vld [vmem:[#allocation5 + $0x58] sm:$0xff]
    %v87 = vld [vmem:[#allocation5 + $0x60] sm:$0xff]
    %v88 = vld [vmem:[#allocation5 + $0x68] sm:$0xff]
    %v89 = vld [vmem:[#allocation5 + $0x70] sm:$0xff]
    %v90 = vld [vmem:[#allocation5 + $0x78] sm:$0xff]
    %v91 = vld [vmem:[#allocation5 + $0x80] sm:$0xff]
    %v92 = vld [vmem:[#allocation5 + $0x88] sm:$0xff]
    %v93 = vld [vmem:[#allocation5 + $0x90] sm:$0xff]
    %v94 = vld [vmem:[#allocation5 + $0x98] sm:$0xff]
    %v95 = vld [vmem:[#allocation5 + $0xa0] sm:$0xff]
    %v96 = vld [vmem:[#allocation5 + $0xa8] sm:$0xff]
    %v97 = vld [vmem:[#allocation5 + $0xb0] sm:$0xff]
    %v98 = vld [vmem:[#allocation5 + $0xb8] sm:$0xff]
    %v99 = vld [vmem:[#allocation5 + $0xc0] sm:$0xff]
    %v100 = vld [vmem:[#allocation5 + $0xc8] sm:$0xff]
    %v101 = vld [vmem:[#allocation5 + $0xd0] sm:$0xff]
    %v102 = vld [vmem:[#allocation5 + $0xd8] sm:$0xff]
    %v103 = vld [vmem:[#allocation5 + $0xe0] sm:$0xff]
    %v104 = vld [vmem:[#allocation5 + $0xe8] sm:$0xff]
    %v105 = vld [vmem:[#allocation5 + $0xf0] sm:$0xff]
    %v106 = vld [vmem:[#allocation5 + $0xf8] sm:$0xff]
    %v107 = vld [vmem:[#allocation5 + $0x100] sm:$0xff]
    %v108 = vld [vmem:[#allocation5 + $0x108] sm:$0xff]
    %v109 = vld [vmem:[#allocation5 + $0x110] sm:$0xff]
    %v110 = vld [vmem:[#allocation5 + $0x118] sm:$0xff]
    %v111 = vld [vmem:[#allocation5 + $0x120] sm:$0xff]
    %v112 = vld [vmem:[#allocation5 + $0x128] sm:$0xff]
    %v113 = vld [vmem:[#allocation5 + $0x130] sm:$0xff]
    %v114 = vld [vmem:[#allocation5 + $0x138] sm:$0xff]
    %v115 = vld [vmem:[#allocation5 + $0x140] sm:$0xff]
    %v116 = vld [vmem:[#allocation5 + $0x148] sm:$0xff]
    %v117 = vld [vmem:[#allocation5 + $0x150] sm:$0xff]
    %v118 = vld [vmem:[#allocation5 + $0x158] sm:$0xff]
    %v119 = vld [vmem:[#allocation5 + $0x160] sm:$0xff]
    %v120 = vld [vmem:[#allocation5 + $0x168] sm:$0xff]
    %v121 = vld [vmem:[#allocation5 + $0x170] sm:$0xff]
    %v122 = vld [vmem:[#allocation5 + $0x178] sm:$0xff]
    %v123 = vld [vmem:[#allocation5 + $0x180] sm:$0xff]
    %v124 = vld [vmem:[#allocation5 + $0x188] sm:$0xff]
    %v125 = vld [vmem:[#allocation5 + $0x190] sm:$0xff]
    %v126 = vld [vmem:[#allocation5 + $0x198] sm:$0xff]
    %v127 = vld [vmem:[#allocation5 + $0x1a0] sm:$0xff]
    %v128 = vld [vmem:[#allocation5 + $0x1a8] sm:$0xff]
    %v129 = vld [vmem:[#allocation5 + $0x1b0] sm:$0xff]
    %v130 = vld [vmem:[#allocation5 + $0x1b8] sm:$0xff]
    %v131 = vld [vmem:[#allocation5 + $0x1c0] sm:$0xff]
    %v132 = vld [vmem:[#allocation5 + $0x1c8] sm:$0xff]
    %v133 = vld [vmem:[#allocation5 + $0x1d0] sm:$0xff]
    %v134 = vld [vmem:[#allocation5 + $0x1d8] sm:$0xff]
    %v135 = vld [vmem:[#allocation5 + $0x1e0] sm:$0xff]
    %v136 = vld [vmem:[#allocation5 + $0x1e8] sm:$0xff]
    %v137 = vld [vmem:[#allocation5 + $0x1f0] sm:$0xff]
    %v138 = vld [vmem:[#allocation5 + $0x1f8] sm:$0xff]
    %v139 = vld [vmem:[#allocation5 + $0x200] sm:$0xff]
    %v140 = vld [vmem:[#allocation5 + $0x208] sm:$0xff]
    %v141 = vld [vmem:[#allocation5 + $0x210] sm:$0xff]
    %v142 = vld [vmem:[#allocation5 + $0x218] sm:$0xff]
    %v143 = vld [vmem:[#allocation5 + $0x220] sm:$0xff]
    %v144 = vld [vmem:[#allocation5 + $0x228] sm:$0xff]
    %v145 = vld [vmem:[#allocation5 + $0x230] sm:$0xff]
    %v146 = vld [vmem:[#allocation5 + $0x238] sm:$0xff]
    %v147 = vld [vmem:[#allocation5 + $0x240] sm:$0xff]
    %v148 = vld [vmem:[#allocation5 + $0x248] sm:$0xff]
    %v149 = vld [vmem:[#allocation5 + $0x250] sm:$0xff]
    %v150 = vld [vmem:[#allocation5 + $0x258] sm:$0xff]
    %v151 = vld [vmem:[#allocation5 + $0x260] sm:$0xff]
    %v152 = vld [vmem:[#allocation5 + $0x268] sm:$0xff]
    %v153 = vld [vmem:[#allocation5 + $0x270] sm:$0xff]
    %v154 = vld [vmem:[#allocation5 + $0x278] sm:$0xff]
    %v155 = vld [vmem:[#allocation5 + $0x280] sm:$0xff]
    %v156 = vld [vmem:[#allocation5 + $0x288] sm:$0xff]
    %v157 = vld [vmem:[#allocation5 + $0x290] sm:$0xff]
    %v158 = vld [vmem:[#allocation5 + $0x298] sm:$0xff]
    %v159 = vld [vmem:[#allocation5 + $0x2a0] sm:$0xff]
    %v160 = vld [vmem:[#allocation5 + $0x2a8] sm:$0xff]
    %v161 = vld [vmem:[#allocation5 + $0x2b0] sm:$0xff]
    %v162 = vld [vmem:[#allocation5 + $0x2b8] sm:$0xff]
    %v163 = vld [vmem:[#allocation5 + $0x2c0] sm:$0xff]
    %v164 = vld [vmem:[#allocation5 + $0x2c8] sm:$0xff]
    %v165 = vld [vmem:[#allocation5 + $0x2d0] sm:$0xff]
    %v166 = vld [vmem:[#allocation5 + $0x2d8] sm:$0xff]
    %v167 = vld [vmem:[#allocation5 + $0x2e0] sm:$0xff]
    %v168 = vld [vmem:[#allocation5 + $0x2e8] sm:$0xff]
    %v169 = vld [vmem:[#allocation5 + $0x2f0] sm:$0xff]
    %v170 = vld [vmem:[#allocation5 + $0x2f8] sm:$0xff]
    %v171 = vld [vmem:[#allocation5 + $0x300] sm:$0xff]
    %v172 = vld [vmem:[#allocation5 + $0x308] sm:$0xff]
    %v173 = vld [vmem:[%s2] sm:$0x3]
    %v175 = vlaneseq
    %v176 = vshrl.u32 %v175, 7
    %v177 = vsub.s32 0, %v176
    %v178 = vrot.slane %v173, %v177
    %v179 = vlaneseq
    %v180 = vshrl.u32 %v179, 7
    %v181 = vsub.s32 1, %v180
    %v182 = vrot.slane %v173, %v181
    %v283 = vunpack.c.l.b16 %v75
    %v284 = vunpack.c.h.b16 %v75
    %v285 = vunpack.c.l.b16 %v76
    %v286 = vunpack.c.h.b16 %v76
    %v287 = vunpack.c.l.b16 %v77
    %v288 = vunpack.c.h.b16 %v77
    %v289 = vunpack.c.l.b16 %v78
    %v290 = vunpack.c.h.b16 %v78
    %v291 = vunpack.c.l.b16 %v79
    %v292 = vunpack.c.h.b16 %v79
    %v293 = vunpack.c.l.b16 %v80
    %v294 = vunpack.c.h.b16 %v80
    %v295 = vunpack.c.l.b16 %v81
    %v296 = vunpack.c.h.b16 %v81
    %v297 = vunpack.c.l.b16 %v82
    %v298 = vunpack.c.h.b16 %v82
    %v299 = vunpack.c.l.b16 %v83
    %v300 = vunpack.c.h.b16 %v83
    %v301 = vunpack.c.l.b16 %v84
    %v302 = vunpack.c.h.b16 %v84
    %v303 = vunpack.c.l.b16 %v85
    %v304 = vunpack.c.h.b16 %v85
    %v305 = vunpack.c.l.b16 %v86
    %v306 = vunpack.c.h.b16 %v86
    %v307 = vunpack.c.l.b16 %v87
    %v308 = vunpack.c.h.b16 %v87
    %v309 = vunpack.c.l.b16 %v88
    %v310 = vunpack.c.h.b16 %v88
    %v311 = vunpack.c.l.b16 %v89
    %v312 = vunpack.c.h.b16 %v89
    %v313 = vunpack.c.l.b16 %v90
    %v314 = vunpack.c.h.b16 %v90
    %v315 = vunpack.c.l.b16 %v91
    %v316 = vunpack.c.h.b16 %v91
    %v317 = vunpack.c.l.b16 %v92
    %v318 = vunpack.c.h.b16 %v92
    %v319 = vunpack.c.l.b16 %v93
    %v320 = vunpack.c.h.b16 %v93
    %v321 = vunpack.c.l.b16 %v94
    %v322 = vunpack.c.h.b16 %v94
    %v323 = vunpack.c.l.b16 %v95
    %v324 = vunpack.c.h.b16 %v95
    %v325 = vunpack.c.l.b16 %v96
    %v326 = vunpack.c.h.b16 %v96
    %v327 = vunpack.c.l.b16 %v97
    %v328 = vunpack.c.h.b16 %v97
    %v329 = vunpack.c.l.b16 %v98
    %v330 = vunpack.c.h.b16 %v98
    %v331 = vunpack.c.l.b16 %v99
    %v332 = vunpack.c.h.b16 %v99
    %v333 = vunpack.c.l.b16 %v100
    %v334 = vunpack.c.h.b16 %v100
    %v335 = vunpack.c.l.b16 %v101
    %v336 = vunpack.c.h.b16 %v101
    %v337 = vunpack.c.l.b16 %v102
    %v338 = vunpack.c.h.b16 %v102
    %v339 = vunpack.c.l.b16 %v103
    %v340 = vunpack.c.h.b16 %v103
    %v341 = vunpack.c.l.b16 %v104
    %v342 = vunpack.c.h.b16 %v104
    %v343 = vunpack.c.l.b16 %v105
    %v344 = vunpack.c.h.b16 %v105
    %v345 = vunpack.c.l.b16 %v106
    %v346 = vunpack.c.h.b16 %v106
    %v347 = vunpack.c.l.b16 %v107
    %v348 = vunpack.c.h.b16 %v107
    %v349 = vunpack.c.l.b16 %v108
    %v350 = vunpack.c.h.b16 %v108
    %v351 = vunpack.c.l.b16 %v109
    %v352 = vunpack.c.h.b16 %v109
    %v353 = vunpack.c.l.b16 %v110
    %v354 = vunpack.c.h.b16 %v110
    %v355 = vunpack.c.l.b16 %v111
    %v356 = vunpack.c.h.b16 %v111
    %v357 = vunpack.c.l.b16 %v112
    %v358 = vunpack.c.h.b16 %v112
    %v359 = vunpack.c.l.b16 %v113
    %v360 = vunpack.c.h.b16 %v113
    %v361 = vunpack.c.l.b16 %v114
    %v362 = vunpack.c.h.b16 %v114
    %v363 = vunpack.c.l.b16 %v115
    %v364 = vunpack.c.h.b16 %v115
    %v365 = vunpack.c.l.b16 %v116
    %v366 = vunpack.c.h.b16 %v116
    %v367 = vunpack.c.l.b16 %v117
    %v368 = vunpack.c.h.b16 %v117
    %v369 = vunpack.c.l.b16 %v118
    %v370 = vunpack.c.h.b16 %v118
    %v371 = vunpack.c.l.b16 %v119
    %v372 = vunpack.c.h.b16 %v119
    %v373 = vunpack.c.l.b16 %v120
    %v374 = vunpack.c.h.b16 %v120
    %v375 = vunpack.c.l.b16 %v121
    %v376 = vunpack.c.h.b16 %v121
    %v377 = vunpack.c.l.b16 %v122
    %v378 = vunpack.c.h.b16 %v122
    %v379 = vunpack.c.l.b16 %v123
    %v380 = vunpack.c.h.b16 %v123
    %v381 = vunpack.c.l.b16 %v124
    %v382 = vunpack.c.h.b16 %v124
    %v383 = vunpack.c.l.b16 %v125
    %v384 = vunpack.c.h.b16 %v125
    %v385 = vunpack.c.l.b16 %v126
    %v386 = vunpack.c.h.b16 %v126
    %v387 = vunpack.c.l.b16 %v127
    %v388 = vunpack.c.h.b16 %v127
    %v389 = vunpack.c.l.b16 %v128
    %v390 = vunpack.c.h.b16 %v128
    %v391 = vunpack.c.l.b16 %v129
    %v392 = vunpack.c.h.b16 %v129
    %v393 = vunpack.c.l.b16 %v130
    %v394 = vunpack.c.h.b16 %v130
    %v395 = vunpack.c.l.b16 %v131
    %v396 = vunpack.c.h.b16 %v131
    %v397 = vunpack.c.l.b16 %v132
    %v398 = vunpack.c.h.b16 %v132
    %v399 = vunpack.c.l.b16 %v133
    %v400 = vunpack.c.h.b16 %v133
    %v401 = vunpack.c.l.b16 %v134
    %v402 = vunpack.c.h.b16 %v134
    %v403 = vunpack.c.l.b16 %v135
    %v404 = vunpack.c.h.b16 %v135
    %v405 = vunpack.c.l.b16 %v136
    %v406 = vunpack.c.h.b16 %v136
    %v407 = vunpack.c.l.b16 %v137
    %v408 = vunpack.c.h.b16 %v137
    %v409 = vunpack.c.l.b16 %v138
    %v410 = vunpack.c.h.b16 %v138
    %v411 = vunpack.c.l.b16 %v139
    %v412 = vunpack.c.h.b16 %v139
    %v413 = vunpack.c.l.b16 %v140
    %v414 = vunpack.c.h.b16 %v140
    %v415 = vunpack.c.l.b16 %v141
    %v416 = vunpack.c.h.b16 %v141
    %v417 = vunpack.c.l.b16 %v142
    %v418 = vunpack.c.h.b16 %v142
    %v419 = vunpack.c.l.b16 %v143
    %v420 = vunpack.c.h.b16 %v143
    %v421 = vunpack.c.l.b16 %v144
    %v422 = vunpack.c.h.b16 %v144
    %v423 = vunpack.c.l.b16 %v145
    %v424 = vunpack.c.h.b16 %v145
    %v425 = vunpack.c.l.b16 %v146
    %v426 = vunpack.c.h.b16 %v146
    %v427 = vunpack.c.l.b16 %v147
    %v428 = vunpack.c.h.b16 %v147
    %v429 = vunpack.c.l.b16 %v148
    %v430 = vunpack.c.h.b16 %v148
    %v431 = vunpack.c.l.b16 %v149
    %v432 = vunpack.c.h.b16 %v149
    %v433 = vunpack.c.l.b16 %v150
    %v434 = vunpack.c.h.b16 %v150
    %v435 = vunpack.c.l.b16 %v151
    %v436 = vunpack.c.h.b16 %v151
    %v437 = vunpack.c.l.b16 %v152
    %v438 = vunpack.c.h.b16 %v152
    %v439 = vunpack.c.l.b16 %v153
    %v440 = vunpack.c.h.b16 %v153
    %v441 = vunpack.c.l.b16 %v154
    %v442 = vunpack.c.h.b16 %v154
    %v443 = vunpack.c.l.b16 %v155
    %v444 = vunpack.c.h.b16 %v155
    %v445 = vunpack.c.l.b16 %v156
    %v446 = vunpack.c.h.b16 %v156
    %v447 = vunpack.c.l.b16 %v157
    %v448 = vunpack.c.h.b16 %v157
    %v449 = vunpack.c.l.b16 %v158
    %v450 = vunpack.c.h.b16 %v158
    %v451 = vunpack.c.l.b16 %v159
    %v452 = vunpack.c.h.b16 %v159
    %v453 = vunpack.c.l.b16 %v160
    %v454 = vunpack.c.h.b16 %v160
    %v455 = vunpack.c.l.b16 %v161
    %v456 = vunpack.c.h.b16 %v161
    %v457 = vunpack.c.l.b16 %v162
    %v458 = vunpack.c.h.b16 %v162
    %v459 = vunpack.c.l.b16 %v163
    %v460 = vunpack.c.h.b16 %v163
    %v461 = vunpack.c.l.b16 %v164
    %v462 = vunpack.c.h.b16 %v164
    %v463 = vunpack.c.l.b16 %v165
    %v464 = vunpack.c.h.b16 %v165
    %v465 = vunpack.c.l.b16 %v166
    %v466 = vunpack.c.h.b16 %v166
    %v467 = vunpack.c.l.b16 %v167
    %v468 = vunpack.c.h.b16 %v167
    %v469 = vunpack.c.l.b16 %v168
    %v470 = vunpack.c.h.b16 %v168
    %v471 = vunpack.c.l.b16 %v169
    %v472 = vunpack.c.h.b16 %v169
    %v473 = vunpack.c.l.b16 %v170
    %v474 = vunpack.c.h.b16 %v170
    %v475 = vunpack.c.l.b16 %v171
    %v476 = vunpack.c.h.b16 %v171
    %v477 = vunpack.c.l.b16 %v172
    %v478 = vunpack.c.h.b16 %v172
    %v479 = vpack.c.b16 %v285, %v283
    %v480 = vpack.c.b16 %v286, %v284
    %v481 = vpack.c.b16 %v289, %v287
    %v482 = vpack.c.b16 %v290, %v288
    %v483 = vpack.c.b16 %v293, %v291
    %v484 = vpack.c.b16 %v294, %v292
    %v485 = vpack.c.b16 %v297, %v295
    %v486 = vpack.c.b16 %v298, %v296
    %v487 = vpack.c.b16 %v301, %v299
    %v488 = vpack.c.b16 %v302, %v300
    %v489 = vpack.c.b16 %v305, %v303
    %v490 = vpack.c.b16 %v306, %v304
    %v491 = vpack.c.b16 %v309, %v307
    %v492 = vpack.c.b16 %v310, %v308
    %v493 = vpack.c.b16 %v313, %v311
    %v494 = vpack.c.b16 %v314, %v312
    %v495 = vpack.c.b16 %v317, %v315
    %v496 = vpack.c.b16 %v318, %v316
    %v497 = vpack.c.b16 %v321, %v319
    %v498 = vpack.c.b16 %v322, %v320
    %v499 = vpack.c.b16 %v325, %v323
    %v500 = vpack.c.b16 %v326, %v324
    %v501 = vpack.c.b16 %v329, %v327
    %v502 = vpack.c.b16 %v330, %v328
    %v503 = vpack.c.b16 %v333, %v331
    %v504 = vpack.c.b16 %v334, %v332
    %v505 = vpack.c.b16 %v337, %v335
    %v506 = vpack.c.b16 %v338, %v336
    %v507 = vpack.c.b16 %v341, %v339
    %v508 = vpack.c.b16 %v342, %v340
    %v509 = vpack.c.b16 %v345, %v343
    %v510 = vpack.c.b16 %v346, %v344
    %v511 = vpack.c.b16 %v349, %v347
    %v512 = vpack.c.b16 %v350, %v348
    %v513 = vpack.c.b16 %v353, %v351
    %v514 = vpack.c.b16 %v354, %v352
    %v515 = vpack.c.b16 %v357, %v355
    %v516 = vpack.c.b16 %v358, %v356
    %v517 = vpack.c.b16 %v361, %v359
    %v518 = vpack.c.b16 %v362, %v360
    %v519 = vpack.c.b16 %v365, %v363
    %v520 = vpack.c.b16 %v366, %v364
    %v521 = vpack.c.b16 %v369, %v367
    %v522 = vpack.c.b16 %v370, %v368
    %v523 = vpack.c.b16 %v373, %v371
    %v524 = vpack.c.b16 %v374, %v372
    %v525 = vpack.c.b16 %v377, %v375
    %v526 = vpack.c.b16 %v378, %v376
    %v527 = vpack.c.b16 %v381, %v379
    %v528 = vpack.c.b16 %v382, %v380
    %v529 = vpack.c.b16 %v385, %v383
    %v530 = vpack.c.b16 %v386, %v384
    %v531 = vpack.c.b16 %v389, %v387
    %v532 = vpack.c.b16 %v390, %v388
    %v533 = vpack.c.b16 %v393, %v391
    %v534 = vpack.c.b16 %v394, %v392
    %v535 = vpack.c.b16 %v397, %v395
    %v536 = vpack.c.b16 %v398, %v396
    %v537 = vpack.c.b16 %v401, %v399
    %v538 = vpack.c.b16 %v402, %v400
    %v539 = vpack.c.b16 %v405, %v403
    %v540 = vpack.c.b16 %v406, %v404
    %v541 = vpack.c.b16 %v409, %v407
    %v542 = vpack.c.b16 %v410, %v408
    %v543 = vpack.c.b16 %v413, %v411
    %v544 = vpack.c.b16 %v414, %v412
    %v545 = vpack.c.b16 %v417, %v415
    %v546 = vpack.c.b16 %v418, %v416
    %v547 = vpack.c.b16 %v421, %v419
    %v548 = vpack.c.b16 %v422, %v420
    %v549 = vpack.c.b16 %v425, %v423
    %v550 = vpack.c.b16 %v426, %v424
    %v551 = vpack.c.b16 %v429, %v427
    %v552 = vpack.c.b16 %v430, %v428
    %v553 = vpack.c.b16 %v433, %v431
    %v554 = vpack.c.b16 %v434, %v432
    %v555 = vpack.c.b16 %v437, %v435
    %v556 = vpack.c.b16 %v438, %v436
    %v557 = vpack.c.b16 %v441, %v439
    %v558 = vpack.c.b16 %v442, %v440
    %v559 = vpack.c.b16 %v445, %v443
    %v560 = vpack.c.b16 %v446, %v444
    %v561 = vpack.c.b16 %v449, %v447
    %v562 = vpack.c.b16 %v450, %v448
    %v563 = vpack.c.b16 %v453, %v451
    %v564 = vpack.c.b16 %v454, %v452
    %v565 = vpack.c.b16 %v457, %v455
    %v566 = vpack.c.b16 %v458, %v456
    %v567 = vpack.c.b16 %v461, %v459
    %v568 = vpack.c.b16 %v462, %v460
    %v569 = vpack.c.b16 %v465, %v463
    %v570 = vpack.c.b16 %v466, %v464
    %v571 = vpack.c.b16 %v469, %v467
    %v572 = vpack.c.b16 %v470, %v468
    %v573 = vpack.c.b16 %v473, %v471
    %v574 = vpack.c.b16 %v474, %v472
    %v575 = vpack.c.b16 %v477, %v475
    %v576 = vpack.c.b16 %v478, %v476
    %vm675 = vcmask 130048
    %v677 = vsel %vm675, %v74, 0
    %679 = vmatprep.subr.bf16.mxu0 %v480
    %680 = vmatpush1.bf16.msra.mxu0 %v479
    %681 = vmatprep.subr.bf16.mxu0 %v482
    %682 = vmatpush1.bf16.msra.mxu0 %v481
    %683 = vmatprep.subr.bf16.mxu0 %v484
    %684 = vmatpush1.bf16.msra.mxu0 %v483
    %685 = vmatprep.subr.bf16.mxu0 %v486
    %686 = vmatpush1.bf16.msra.mxu0 %v485
    %687 = vmatprep.subr.bf16.mxu0 %v488
    %688 = vmatpush1.bf16.msra.mxu0 %v487
    %689 = vmatprep.subr.bf16.mxu0 %v490
    %690 = vmatpush1.bf16.msra.mxu0 %v489
    %691 = vmatprep.subr.bf16.mxu0 %v492
    %692 = vmatpush1.bf16.msra.mxu0 %v491
    %693 = vmatprep.subr.bf16.mxu0 %v494
    %694 = vmatpush1.bf16.msra.mxu0 %v493
    %695 = vmatprep.subr.bf16.mxu0 %v496
    %696 = vmatpush1.bf16.msra.mxu0 %v495
    %697 = vmatprep.subr.bf16.mxu0 %v498
    %698 = vmatpush1.bf16.msra.mxu0 %v497
    %699 = vmatprep.subr.bf16.mxu0 %v500
    %700 = vmatpush1.bf16.msra.mxu0 %v499
    %701 = vmatprep.subr.bf16.mxu0 %v502
    %702 = vmatpush1.bf16.msra.mxu0 %v501
    %703 = vmatprep.subr.bf16.mxu0 %v504
    %704 = vmatpush1.bf16.msra.mxu0 %v503
    %705 = vmatprep.subr.bf16.mxu0 %v506
    %706 = vmatpush1.bf16.msra.mxu0 %v505
    %707 = vmatprep.subr.bf16.mxu0 %v508
    %708 = vmatpush1.bf16.msra.mxu0 %v507
    %709 = vmatprep.subr.bf16.mxu0 %v510
    %710 = vmatpush1.bf16.msra.mxu0 %v509
    %711 = vmatprep.mubr.bf16.mxu0 %v69
    %712 = vmatmul.mubr.bf16.gmra.mrb[0].mxu0 %v68
    %v713 = vpop.f32.mrb[0].mxu0
    %v714 = vadd.f32 %v178, %v713
    %v715 = vpop.f32.mrb[0].mxu0
    %v716 = vadd.f32 %v182, %v715
    %v717 = vpop.f32.mrb[0].mxu0
    %v718 = vpop.f32.mrb[0].mxu0
    %719 = vdwg.mxu0
    %720 = vmatprep.subr.bf16.mxu0 %v512
    %721 = vmatpush1.bf16.msra.mxu0 %v511
    %722 = vmatprep.subr.bf16.mxu0 %v514
    %723 = vmatpush1.bf16.msra.mxu0 %v513
    %724 = vmatprep.subr.bf16.mxu0 %v516
    %725 = vmatpush1.bf16.msra.mxu0 %v515
    %726 = vmatprep.subr.bf16.mxu0 %v518
    %727 = vmatpush1.bf16.msra.mxu0 %v517
    %728 = vmatprep.subr.bf16.mxu0 %v520
    %729 = vmatpush1.bf16.msra.mxu0 %v519
    %730 = vmatprep.subr.bf16.mxu0 %v522
    %731 = vmatpush1.bf16.msra.mxu0 %v521
    %732 = vmatprep.subr.bf16.mxu0 %v524
    %733 = vmatpush1.bf16.msra.mxu0 %v523
    %734 = vmatprep.subr.bf16.mxu0 %v526
    %735 = vmatpush1.bf16.msra.mxu0 %v525
    %736 = vmatprep.subr.bf16.mxu0 %v528
    %737 = vmatpush1.bf16.msra.mxu0 %v527
    %738 = vmatprep.subr.bf16.mxu0 %v530
    %739 = vmatpush1.bf16.msra.mxu0 %v529
    %740 = vmatprep.subr.bf16.mxu0 %v532
    %741 = vmatpush1.bf16.msra.mxu0 %v531
    %742 = vmatprep.subr.bf16.mxu0 %v534
    %743 = vmatpush1.bf16.msra.mxu0 %v533
    %744 = vmatprep.subr.bf16.mxu0 %v536
    %745 = vmatpush1.bf16.msra.mxu0 %v535
    %746 = vmatprep.subr.bf16.mxu0 %v538
    %747 = vmatpush1.bf16.msra.mxu0 %v537
    %748 = vmatprep.subr.bf16.mxu0 %v540
    %749 = vmatpush1.bf16.msra.mxu0 %v539
    %750 = vmatprep.subr.bf16.mxu0 %v542
    %751 = vmatpush1.bf16.msra.mxu0 %v541
    %752 = vmatprep.mubr.bf16.mxu0 %v71
    %753 = vmatmul.mubr.bf16.gmra.mrb[0].mxu0 %v70
    %v754 = vpop.f32.mrb[0].mxu0
    %v755 = vadd.f32 %v714, %v754
    %v756 = vpop.f32.mrb[0].mxu0
    %v757 = vadd.f32 %v716, %v756
    %v758 = vpop.f32.mrb[0].mxu0
    %v759 = vpop.f32.mrb[0].mxu0
    %760 = vdwg.mxu0
    %761 = vmatprep.subr.bf16.mxu0 %v544
    %762 = vmatpush1.bf16.msra.mxu0 %v543
    %763 = vmatprep.subr.bf16.mxu0 %v546
    %764 = vmatpush1.bf16.msra.mxu0 %v545
    %765 = vmatprep.subr.bf16.mxu0 %v548
    %766 = vmatpush1.bf16.msra.mxu0 %v547
    %767 = vmatprep.subr.bf16.mxu0 %v550
    %768 = vmatpush1.bf16.msra.mxu0 %v549
    %769 = vmatprep.subr.bf16.mxu0 %v552
    %770 = vmatpush1.bf16.msra.mxu0 %v551
    %771 = vmatprep.subr.bf16.mxu0 %v554
    %772 = vmatpush1.bf16.msra.mxu0 %v553
    %773 = vmatprep.subr.bf16.mxu0 %v556
    %774 = vmatpush1.bf16.msra.mxu0 %v555
    %775 = vmatprep.subr.bf16.mxu0 %v558
    %776 = vmatpush1.bf16.msra.mxu0 %v557
    %777 = vmatprep.subr.bf16.mxu0 %v560
    %778 = vmatpush1.bf16.msra.mxu0 %v559
    %779 = vmatprep.subr.bf16.mxu0 %v562
    %780 = vmatpush1.bf16.msra.mxu0 %v561
    %781 = vmatprep.subr.bf16.mxu0 %v564
    %782 = vmatpush1.bf16.msra.mxu0 %v563
    %783 = vmatprep.subr.bf16.mxu0 %v566
    %784 = vmatpush1.bf16.msra.mxu0 %v565
    %785 = vmatprep.subr.bf16.mxu0 %v568
    %786 = vmatpush1.bf16.msra.mxu0 %v567
    %787 = vmatprep.subr.bf16.mxu0 %v570
    %788 = vmatpush1.bf16.msra.mxu0 %v569
    %789 = vmatprep.subr.bf16.mxu0 %v572
    %790 = vmatpush1.bf16.msra.mxu0 %v571
    %791 = vmatprep.subr.bf16.mxu0 %v574
    %792 = vmatpush1.bf16.msra.mxu0 %v573
    %793 = vmatprep.mubr.bf16.mxu0 %v73
    %794 = vmatmul.mubr.bf16.gmra.mrb[0].mxu0 %v72
    %v795 = vpop.f32.mrb[0].mxu0
    %v796 = vadd.f32 %v755, %v795
    %v797 = vpop.f32.mrb[0].mxu0
    %v798 = vadd.f32 %v757, %v797
    %v799 = vpop.f32.mrb[0].mxu0
    %v800 = vpop.f32.mrb[0].mxu0
    %801 = vdwg.mxu0
    %802 = vmatprep.subr.bf16.mxu0 %v576
    %803 = vmatpush1.bf16.msra.mxu0 %v575
    %804 = vmatprep.subr.bf16.mxu0 0
    %805 = vmatpush1.bf16.msra.mxu0 0
    %806 = vmatprep.subr.bf16.mxu0 0
    %807 = vmatpush1.bf16.msra.mxu0 0
    %808 = vmatprep.subr.bf16.mxu0 0
    %809 = vmatpush1.bf16.msra.mxu0 0
    %810 = vmatprep.subr.bf16.mxu0 0
    %811 = vmatpush1.bf16.msra.mxu0 0
    %812 = vmatprep.subr.bf16.mxu0 0
    %813 = vmatpush1.bf16.msra.mxu0 0
    %814 = vmatprep.subr.bf16.mxu0 0
    %815 = vmatpush1.bf16.msra.mxu0 0
    %816 = vmatprep.subr.bf16.mxu0 0
    %817 = vmatpush1.bf16.msra.mxu0 0
    %818 = vmatprep.subr.bf16.mxu0 0
    %819 = vmatpush1.bf16.msra.mxu0 0
    %820 = vmatprep.subr.bf16.mxu0 0
    %821 = vmatpush1.bf16.msra.mxu0 0
    %822 = vmatprep.subr.bf16.mxu0 0
    %823 = vmatpush1.bf16.msra.mxu0 0
    %824 = vmatprep.subr.bf16.mxu0 0
    %825 = vmatpush1.bf16.msra.mxu0 0
    %826 = vmatprep.subr.bf16.mxu0 0
    %827 = vmatpush1.bf16.msra.mxu0 0
    %828 = vmatprep.subr.bf16.mxu0 0
    %829 = vmatpush1.bf16.msra.mxu0 0
    %830 = vmatprep.subr.bf16.mxu0 0
    %831 = vmatpush1.bf16.msra.mxu0 0
    %832 = vmatprep.subr.bf16.mxu0 0
    %833 = vmatpush1.bf16.msra.mxu0 0
    %834 = vmatprep.mubr.bf16.mxu0 0
    %835 = vmatmul.mubr.bf16.gmra.mrb[0].mxu0 %v677
    %v836 = vpop.f32.mrb[0].mxu0
    %v837 = vadd.f32 %v796, %v836
    %v838 = vpop.f32.mrb[0].mxu0
    %v839 = vadd.f32 %v798, %v838
    %v840 = vpop.f32.mrb[0].mxu0
    %v841 = vpop.f32.mrb[0].mxu0
    %842 = vdwg.mxu0
    %v843 = vmax.f32 %v837, 0.0
    %v844 = vmax.f32 %v839, 0.0
    %v845 = vpack.c.bf16 %v843, %v843
    %v846 = vpack.c.bf16 %v844, %v844
    %v847 = vld [vmem:[#allocation7] sm:$0xf]
    %v848 = vld [vmem:[#allocation7 + $0x4] sm:$0xf]
    %v849 = vld [vmem:[#allocation7 + $0x8] sm:$0xf]
    %v850 = vld [vmem:[#allocation7 + $0xc] sm:$0xf]
    %v851 = vld [vmem:[#allocation7 + $0x10] sm:$0xf]
    %v852 = vld [vmem:[#allocation7 + $0x14] sm:$0xf]
    %v853 = vld [vmem:[#allocation7 + $0x18] sm:$0xf]
    %v854 = vld [vmem:[#allocation7 + $0x1c] sm:$0xf]
    %v855 = vld [vmem:[#allocation7 + $0x20] sm:$0xf]
    %v856 = vld [vmem:[#allocation7 + $0x24] sm:$0xf]
    %v857 = vld [vmem:[#allocation7 + $0x28] sm:$0xf]
    %v858 = vld [vmem:[#allocation7 + $0x2c] sm:$0xf]
    %v859 = vld [vmem:[#allocation7 + $0x30] sm:$0xf]
    %v860 = vld [vmem:[#allocation7 + $0x34] sm:$0xf]
    %v861 = vld [vmem:[#allocation7 + $0x38] sm:$0xf]
    %v862 = vld [vmem:[#allocation7 + $0x3c] sm:$0xf]
    %v863 = vld [vmem:[#allocation7 + $0x40] sm:$0xf]
    %v864 = vld [vmem:[#allocation7 + $0x44] sm:$0xf]
    %v865 = vld [vmem:[#allocation7 + $0x48] sm:$0xf]
    %v866 = vld [vmem:[#allocation7 + $0x4c] sm:$0xf]
    %v867 = vld [vmem:[#allocation7 + $0x50] sm:$0xf]
    %v868 = vld [vmem:[#allocation7 + $0x54] sm:$0xf]
    %v869 = vld [vmem:[#allocation7 + $0x58] sm:$0xf]
    %v870 = vld [vmem:[#allocation7 + $0x5c] sm:$0xf]
    %v871 = vld [vmem:[#allocation7 + $0x60] sm:$0xf]
    %v872 = vld [vmem:[#allocation7 + $0x64] sm:$0xf]
    %v873 = vld [vmem:[#allocation7 + $0x68] sm:$0xf]
    %v874 = vld [vmem:[#allocation7 + $0x6c] sm:$0xf]
    %v875 = vld [vmem:[#allocation7 + $0x70] sm:$0xf]
    %v876 = vld [vmem:[#allocation7 + $0x74] sm:$0xf]
    %v877 = vld [vmem:[#allocation7 + $0x78] sm:$0xf]
    %v878 = vld [vmem:[#allocation7 + $0x7c] sm:$0xf]
    %v879 = vld [vmem:[%s4] sm:$0x1]
    %v881 = vlaneseq
    %v882 = vshrl.u32 %v881, 7
    %v883 = vsub.s32 0, %v882
    %v884 = vrot.slane %v879, %v883
    %v918 = vunpack.c.l.b16 %v847
    %v919 = vunpack.c.l.b16 %v848
    %v920 = vunpack.c.l.b16 %v849
    %v921 = vunpack.c.l.b16 %v850
    %v922 = vunpack.c.l.b16 %v851
    %v923 = vunpack.c.l.b16 %v852
    %v924 = vunpack.c.l.b16 %v853
    %v925 = vunpack.c.l.b16 %v854
    %v926 = vunpack.c.l.b16 %v855
    %v927 = vunpack.c.l.b16 %v856
    %v928 = vunpack.c.l.b16 %v857
    %v929 = vunpack.c.l.b16 %v858
    %v930 = vunpack.c.l.b16 %v859
    %v931 = vunpack.c.l.b16 %v860
    %v932 = vunpack.c.l.b16 %v861
    %v933 = vunpack.c.l.b16 %v862
    %v934 = vunpack.c.l.b16 %v863
    %v935 = vunpack.c.l.b16 %v864
    %v936 = vunpack.c.l.b16 %v865
    %v937 = vunpack.c.l.b16 %v866
    %v938 = vunpack.c.l.b16 %v867
    %v939 = vunpack.c.l.b16 %v868
    %v940 = vunpack.c.l.b16 %v869
    %v941 = vunpack.c.l.b16 %v870
    %v942 = vunpack.c.l.b16 %v871
    %v943 = vunpack.c.l.b16 %v872
    %v944 = vunpack.c.l.b16 %v873
    %v945 = vunpack.c.l.b16 %v874
    %v946 = vunpack.c.l.b16 %v875
    %v947 = vunpack.c.l.b16 %v876
    %v948 = vunpack.c.l.b16 %v877
    %v949 = vunpack.c.l.b16 %v878
    %v950 = vpack.c.b16 %v919, %v918
    %v951 = vpack.c.b16 %v921, %v920
    %v952 = vpack.c.b16 %v923, %v922
    %v953 = vpack.c.b16 %v925, %v924
    %v954 = vpack.c.b16 %v927, %v926
    %v955 = vpack.c.b16 %v929, %v928
    %v956 = vpack.c.b16 %v931, %v930
    %v957 = vpack.c.b16 %v933, %v932
    %v958 = vpack.c.b16 %v935, %v934
    %v959 = vpack.c.b16 %v937, %v936
    %v960 = vpack.c.b16 %v939, %v938
    %v961 = vpack.c.b16 %v941, %v940
    %v962 = vpack.c.b16 %v943, %v942
    %v963 = vpack.c.b16 %v945, %v944
    %v964 = vpack.c.b16 %v947, %v946
    %v965 = vpack.c.b16 %v949, %v948
    %982 = vmatprep.subr.bf16.mxu0 0
    %983 = vmatpush1.bf16.msra.mxu0 %v950
    %984 = vmatprep.subr.bf16.mxu0 0
    %985 = vmatpush1.bf16.msra.mxu0 %v951
    %986 = vmatprep.subr.bf16.mxu0 0
    %987 = vmatpush1.bf16.msra.mxu0 %v952
    %988 = vmatprep.subr.bf16.mxu0 0
    %989 = vmatpush1.bf16.msra.mxu0 %v953
    %990 = vmatprep.subr.bf16.mxu0 0
    %991 = vmatpush1.bf16.msra.mxu0 %v954
    %992 = vmatprep.subr.bf16.mxu0 0
    %993 = vmatpush1.bf16.msra.mxu0 %v955
    %994 = vmatprep.subr.bf16.mxu0 0
    %995 = vmatpush1.bf16.msra.mxu0 %v956
    %996 = vmatprep.subr.bf16.mxu0 0
    %997 = vmatpush1.bf16.msra.mxu0 %v957
    %998 = vmatprep.subr.bf16.mxu0 0
    %999 = vmatpush1.bf16.msra.mxu0 %v958
    %1000 = vmatprep.subr.bf16.mxu0 0
    %1001 = vmatpush1.bf16.msra.mxu0 %v959
    %1002 = vmatprep.subr.bf16.mxu0 0
    %1003 = vmatpush1.bf16.msra.mxu0 %v960
    %1004 = vmatprep.subr.bf16.mxu0 0
    %1005 = vmatpush1.bf16.msra.mxu0 %v961
    %1006 = vmatprep.subr.bf16.mxu0 0
    %1007 = vmatpush1.bf16.msra.mxu0 %v962
    %1008 = vmatprep.subr.bf16.mxu0 0
    %1009 = vmatpush1.bf16.msra.mxu0 %v963
    %1010 = vmatprep.subr.bf16.mxu0 0
    %1011 = vmatpush1.bf16.msra.mxu0 %v964
    %1012 = vmatprep.subr.bf16.mxu0 0
    %1013 = vmatpush1.bf16.msra.mxu0 %v965
    %1014 = vmatprep.mubr.bf16.mxu0 %v846
    %1015 = vmatmul.mubr.bf16.gmra.mrb[0].mxu0 %v845
    %v1016 = vpop.f32.mrb[0].mxu0
    %v1017 = vadd.f32 %v884, %v1016
    %v1018 = vpop.f32.mrb[0].mxu0
    %v1019 = vpop.f32.mrb[0].mxu0
    %v1020 = vpop.f32.mrb[0].mxu0
    %1021 = vdwg.mxu0
    %1022 = vst [vmem:[#allocation8] sm:$0xff] %v1017
    // Predicated region
    $region34: #{neural_net_forward.1} parent=1 // pred_check
      _
    $region35: #{neural_net_forward.1} parent=1 // pred_check_branch
      %1024 = sbr.rel (0) target = $region37
    $region36: #{neural_net_forward.1} parent=1 // pred_region
      %s1026 = ssub.s32 128, 128
      %1027 = vsyncadd [#allocation4], %s1026
      %s1029 = sshll.u32 [#allocation8], 4
      %s1030 = int_to_ptr.vmem [resolvable:$true] %s1029
      %1032 = dma.vmem_to_hbm [thread:$0]  %s1030, 128, %s5, [#allocation4]
    $region37: #{neural_net_forward.1} parent=1 // pred_fallthru
      _
    // Predicated region
    $region38: #{neural_net_forward.1} parent=1 // pred_check
      _
    $region39: #{neural_net_forward.1} parent=1 // pred_check_branch
      %1034 = sbr.rel (0) target = $region41
    $region40: #{neural_net_forward.1} parent=1 // pred_region
      %1035 = dma.done [#allocation4], 128
    $region41: #{neural_net_forward.1} parent=1 // pred_fallthru
      _
    %1036 = vsyncpa [#allocation3], 1
    %1037 = vsyncpa [#allocation6], 1
    %1038 = vsyncpa [#allocation4], 1

</llo_original>
